<compile_context>
chip_gen: v7x
topology: tpu7x:2x2x1
jax: 0.10.0
libtpu: 0.0.40
codegen_flags: <defaults>
</compile_context>

<pallas_src>
import functools

import jax
import jax.numpy as jnp
from jax.experimental import pallas as pl
from jax.experimental.pallas import tpu as pltpu

_LANE = 128


def _vmem_budget_bytes() -> int:
    """Budget for the double-buffered x stream, generation aware."""
    try:
        cap = pltpu.get_tpu_info().vmem_capacity_bytes
    except Exception:
        cap = 64 * 1024 * 1024  # conservative: v7x physical per-TC VMEM
    # ~1/8 of physical VMEM leaves ample headroom vs. the scoped default on all gens.
    return max(cap // 8, 2 * 1024 * 1024)


def _pick_tiles(b: int, c: int, hw: int, itemsize: int):
    """Pick (Bt, tk): batch rows per grid step and lane-aligned HW tile."""
    budget = _vmem_budget_bytes()
    hw_pad = ((hw + _LANE - 1) // _LANE) * _LANE
    tk_cands = [t for t in (2048, 1024, 512, 256, 128) if t <= max(hw_pad, _LANE)]
    bt_cands = sorted({bt for bt in (8, 4, 2, 1, b if b <= 8 else 0)
                       if bt > 0 and b % bt == 0}, reverse=True)
    best = None
    for bt in bt_cands:
        for tk in tk_cands:
            if 2 * bt * c * tk * itemsize <= budget:      # double-buffered x blocks
                key = (bt * tk, bt)
                if best is None or key > best[0]:
                    best = (key, bt, tk)
    if best is None:                                      # tiny budget fallback
        return bt_cands[-1], _LANE
    return best[1], best[2]


def _channel_attention_kernel(x_ref, w1_ref, w2_ref, o_ref, sum_acc, max_acc,
                              *, hw, tk, bt, c, need_mask):
    # Grid = (B//bt, num_k).  The HW-reduction axis k MUST remain the last
    # (fastest-varying) grid axis: the scratch accumulators are re-initialised
    # at k == 0 for every batch block and finalized at the last k.
    k = pl.program_id(1)

    @pl.when(k == 0)
    def _init():
        sum_acc[...] = jnp.zeros_like(sum_acc)
        max_acc[...] = jnp.full_like(max_acc, -jnp.inf)

    if need_mask:
        lane = jax.lax.broadcasted_iota(jnp.int32, (bt, c, _LANE), 2)
        base = k * tk

    # Lane-wide partial accumulators: per-chunk work is pure VPU add/max that
    # hides under the streaming DMA; cross-lane reduce only happens in finalize.
    for j in range(tk // _LANE):
        chunk = x_ref[:, :, j * _LANE:(j + 1) * _LANE].astype(jnp.float32)
        if need_mask:
            valid = lane < (hw - base - j * _LANE)        # padded lanes -> masked
            sum_acc[...] += jnp.where(valid, chunk, 0.0)
            max_acc[...] = jnp.maximum(max_acc[...],
                                       jnp.where(valid, chunk, -jnp.inf))
        else:
            sum_acc[...] += chunk
            max_acc[...] = jnp.maximum(max_acc[...], chunk)

    @pl.when(k == pl.num_programs(1) - 1)
    def _finalize():
        avg = jnp.sum(sum_acc[...], axis=-1) * (1.0 / hw)          # (bt, C)
        mx = jnp.max(max_acc[...], axis=-1)                        # (bt, C)
        w1 = w1_ref[...].astype(jnp.float32)                       # (C//4, C)
        w2 = w2_ref[...].astype(jnp.float32)                       # (C, C//4)
        dn = (((1,), (1,)), ((), ()))                              # contract channel dims
        # fc2 is linear, so fc2(relu(fc1(avg))) + fc2(relu(fc1(max)))
        #   == w2 applied to (relu(fc1(avg)) + relu(fc1(max))).
        h = (jnp.maximum(jax.lax.dot_general(
                 avg, w1, dn, preferred_element_type=jnp.float32), 0.0)
             + jnp.maximum(jax.lax.dot_general(
                 mx, w1, dn, preferred_element_type=jnp.float32), 0.0))
        o = jax.lax.dot_general(h, w2, dn, preferred_element_type=jnp.float32)
        o_ref[...] = jax.nn.sigmoid(o).astype(o_ref.dtype)         # (bt, C)


def channel_attention(x, fc1_w, fc2_w):
    """x: (B, C, H, W) NCHW.  fc1_w: (C//4, C) (PyTorch Conv2d 1x1 weight, squeezed).
    fc2_w: (C, C//4).  Returns (B, C, 1, 1) matching torch ChannelAttention."""
    B, C, H, W = x.shape
    C4 = fc1_w.shape[0]
    HW = H * W
    bt, tk = _pick_tiles(B, C, HW, x.dtype.itemsize)
    num_k = pl.cdiv(HW, tk)
    need_mask = (HW % tk) != 0

    # Free reshapes only (leading-axis split / trailing merge): no HBM transpose.
    # The split keeps kernel block shapes legal (last two dims (C, tk)) for any bt.
    x4 = x.reshape(B // bt, bt, C, HW)

    kernel = functools.partial(_channel_attention_kernel, hw=HW, tk=tk, bt=bt,
                               c=C, need_mask=need_mask)
    out = pl.pallas_call(
        kernel,
        out_shape=jax.ShapeDtypeStruct((B // bt, bt, C), x.dtype),
        grid=(B // bt, num_k),
        in_specs=[
            pl.BlockSpec((None, bt, C, tk), lambda b, k: (b, 0, 0, k)),  # x stream
            pl.BlockSpec((C4, C), lambda b, k: (0, 0)),                  # fc1 weight
            pl.BlockSpec((C, C4), lambda b, k: (0, 0)),                  # fc2 weight
        ],
        out_specs=pl.BlockSpec((None, bt, C), lambda b, k: (b, 0, 0)),
        scratch_shapes=[
            pltpu.VMEM((bt, C, _LANE), jnp.float32),   # lane-wide running sum (avg pool)
            pltpu.VMEM((bt, C, _LANE), jnp.float32),   # lane-wide running max
        ],
        compiler_params=pltpu.CompilerParams(
            # batch axis parallel (megacore sharding); reduction axis arbitrary.
            # Note: with B == 1 on v7x one TensorCore idles for this mem-bound op.
            dimension_semantics=("parallel", "arbitrary"),
            # No vmem_limit_bytes: block sizes are chosen to fit the default
            # scoped limit with headroom on v5e/v6e/v7x.
        ),
    )(x4, fc1_w, fc2_w)
    return out.reshape(B, C, 1, 1)


# --------------------------------------------------------------------------
# Pure-JAX reference (f32 math) for numerical checks
# --------------------------------------------------------------------------
def ref_channel_attention(x, fc1_w, fc2_w):
    xf = x.astype(jnp.float32)
    avg = xf.mean(axis=(2, 3))                                   # (B, C)
    mx = xf.max(axis=(2, 3))                                     # (B, C)
    w1 = fc1_w.astype(jnp.float32)
    w2 = fc2_w.astype(jnp.float32)

    def mlp(p):
        return jnp.maximum(p @ w1.T, 0.0) @ w2.T

    out = jax.nn.sigmoid(mlp(avg) + mlp(mx))                     # (B, C)
    return out.reshape(x.shape[0], x.shape[1], 1, 1)


# --------------------------------------------------------------------------
if __name__ == "__main__":
    fwd = jax.jit(channel_attention)
    key = jax.random.PRNGKey(0)

    def run_case(B, C, H, W, dtype, tol):
        global key
        key, kx, k1, k2 = jax.random.split(key, 4)
        C4 = C // 4
        x = jax.random.normal(kx, (B, C, H, W), dtype=jnp.float32).astype(dtype)
        # PyTorch Conv2d(in, out, 1, bias=False) weight is (out, in, 1, 1); squeezed.
        fc1_w = (0.2 * jax.random.normal(k1, (C4, C), dtype=jnp.float32)).astype(dtype)
        fc2_w = (0.2 * jax.random.normal(k2, (C, C4), dtype=jnp.float32)).astype(dtype)
        out = jax.block_until_ready(fwd(x, fc1_w, fc2_w))
        ref = ref_channel_attention(x, fc1_w, fc2_w)
        assert out.shape == (B, C, 1, 1)
        err = float(jnp.max(jnp.abs(out.astype(jnp.float32) - ref)))
        assert err < tol, f"mismatch at {(B, C, H, W, dtype)}: max abs err = {err}"

    # in_planes = 32 -> hidden = 8; HW = 256 (divisible path, Bt-blocked)
    run_case(2, 32, 16, 16, jnp.float32, 1e-5)
    # HW = 49 (7x7): masked tail tile path
    run_case(2, 32, 7, 7, jnp.float32, 1e-5)
    # odd HW, different C, Bt = B = 4
    run_case(4, 16, 9, 13, jnp.float32, 1e-5)
    # bf16 activations/weights (f32 accumulation inside the kernel)
    run_case(2, 32, 7, 7, jnp.bfloat16, 2e-2)

    print("KERNEL_OK")
</pallas_src>

<mosaic_0001>
module attributes {stable_mosaic.version = 11 : i64} {
  func.func @_channel_attention_kernel(%arg0: i32, %arg1: i32, %arg2: memref<1x2x32x256xf32, #tpu.memory_space<vmem>>, %arg3: memref<8x32xf32, #tpu.memory_space<vmem>>, %arg4: memref<32x8xf32, #tpu.memory_space<vmem>>, %arg5: memref<1x2x32xf32, #tpu.memory_space<vmem>>, %arg6: memref<2x32x128xf32, #tpu.memory_space<vmem>>, %arg7: memref<2x32x128xf32, #tpu.memory_space<vmem>>) attributes {dimension_semantics = [#tpu.dimension_semantics<parallel>, #tpu.dimension_semantics<arbitrary>], iteration_bounds = array<i64: 1, 1>, scalar_prefetch = 0 : i64, scratch_operands = 2 : i64, tpu.core_type = #tpu.core_type<tc>, window_params = [{transform_indices = @transform_0, window_bounds = array<i64: 1, 2, 32, 256>}, {pipeline_mode = #tpu.pipeline_mode<synchronous>, transform_indices = @transform_1, window_bounds = array<i64: 8, 32>}, {pipeline_mode = #tpu.pipeline_mode<synchronous>, transform_indices = @transform_2, window_bounds = array<i64: 32, 8>}, {transform_indices = @transform_3, window_bounds = array<i64: 1, 2, 32>}]} {
    %c0_i32 = arith.constant 0 : i32
    %0 = arith.cmpi eq, %arg1, %c0_i32 : i32
    %1 = arith.extui %0 : i1 to i32
    %c0_i32_0 = arith.constant 0 : i32
    %2 = arith.cmpi ne, %1, %c0_i32_0 : i32
    scf.if %2 {
      %cst = arith.constant 0.000000e+00 : f32
      %22 = vector.broadcast %cst : f32 to vector<2x32x128xf32>
      %c0_33 = arith.constant 0 : index
      %c0_34 = arith.constant 0 : index
      %c0_35 = arith.constant 0 : index
      %23 = vector.load %arg6[%c0_33, %c0_34, %c0_35] : memref<2x32x128xf32, #tpu.memory_space<vmem>>, vector<2x32x128xf32>
      tpu.vector_store %arg6[%c0_33, %c0_34, %c0_35], %22 {strides = array<i32>} : memref<2x32x128xf32, #tpu.memory_space<vmem>>, vector<2x32x128xf32>,
      %cst_36 = arith.constant 0xFF800000 : f32
      %24 = vector.broadcast %cst_36 : f32 to vector<2x32x128xf32>
      %c0_37 = arith.constant 0 : index
      %c0_38 = arith.constant 0 : index
      %c0_39 = arith.constant 0 : index
      %25 = vector.load %arg7[%c0_37, %c0_38, %c0_39] : memref<2x32x128xf32, #tpu.memory_space<vmem>>, vector<2x32x128xf32>
      tpu.vector_store %arg7[%c0_37, %c0_38, %c0_39], %24 {strides = array<i32>} : memref<2x32x128xf32, #tpu.memory_space<vmem>>, vector<2x32x128xf32>,
    } else {
    }
    %c0 = arith.constant 0 : index
    %c0_1 = arith.constant 0 : index
    %c0_2 = arith.constant 0 : index
    %c0_3 = arith.constant 0 : index
    %3 = vector.load %arg2[%c0, %c0_1, %c0_2, %c0_3] : memref<1x2x32x256xf32, #tpu.memory_space<vmem>>, vector<1x2x32x128xf32>
    %4 = vector.shape_cast %3 : vector<1x2x32x128xf32> to vector<2x32x128xf32>
    %c0_4 = arith.constant 0 : index
    %c0_5 = arith.constant 0 : index
    %c0_6 = arith.constant 0 : index
    %5 = vector.load %arg6[%c0_4, %c0_5, %c0_6] : memref<2x32x128xf32, #tpu.memory_space<vmem>>, vector<2x32x128xf32>
    %6 = arith.addf %5, %4 : vector<2x32x128xf32>
    %c0_7 = arith.constant 0 : index
    %c0_8 = arith.constant 0 : index
    %c0_9 = arith.constant 0 : index
    %7 = vector.load %arg6[%c0_7, %c0_8, %c0_9] : memref<2x32x128xf32, #tpu.memory_space<vmem>>, vector<2x32x128xf32>
    tpu.vector_store %arg6[%c0_7, %c0_8, %c0_9], %6 {strides = array<i32>} : memref<2x32x128xf32, #tpu.memory_space<vmem>>, vector<2x32x128xf32>,
    %c0_10 = arith.constant 0 : index
    %c0_11 = arith.constant 0 : index
    %c0_12 = arith.constant 0 : index
    %8 = vector.load %arg7[%c0_10, %c0_11, %c0_12] : memref<2x32x128xf32, #tpu.memory_space<vmem>>, vector<2x32x128xf32>
    %9 = arith.maximumf %8, %4 : vector<2x32x128xf32>
    %c0_13 = arith.constant 0 : index
    %c0_14 = arith.constant 0 : index
    %c0_15 = arith.constant 0 : index
    %10 = vector.load %arg7[%c0_13, %c0_14, %c0_15] : memref<2x32x128xf32, #tpu.memory_space<vmem>>, vector<2x32x128xf32>
    tpu.vector_store %arg7[%c0_13, %c0_14, %c0_15], %9 {strides = array<i32>} : memref<2x32x128xf32, #tpu.memory_space<vmem>>, vector<2x32x128xf32>,
    %c0_16 = arith.constant 0 : index
    %c0_17 = arith.constant 0 : index
    %c0_18 = arith.constant 0 : index
    %c128 = arith.constant 128 : index
    %11 = vector.load %arg2[%c0_16, %c0_17, %c0_18, %c128] : memref<1x2x32x256xf32, #tpu.memory_space<vmem>>, vector<1x2x32x128xf32>
    %12 = vector.shape_cast %11 : vector<1x2x32x128xf32> to vector<2x32x128xf32>
    %c0_19 = arith.constant 0 : index
    %c0_20 = arith.constant 0 : index
    %c0_21 = arith.constant 0 : index
    %13 = vector.load %arg6[%c0_19, %c0_20, %c0_21] : memref<2x32x128xf32, #tpu.memory_space<vmem>>, vector<2x32x128xf32>
    %14 = arith.addf %13, %12 : vector<2x32x128xf32>
    %c0_22 = arith.constant 0 : index
    %c0_23 = arith.constant 0 : index
    %c0_24 = arith.constant 0 : index
    %15 = vector.load %arg6[%c0_22, %c0_23, %c0_24] : memref<2x32x128xf32, #tpu.memory_space<vmem>>, vector<2x32x128xf32>
    tpu.vector_store %arg6[%c0_22, %c0_23, %c0_24], %14 {strides = array<i32>} : memref<2x32x128xf32, #tpu.memory_space<vmem>>, vector<2x32x128xf32>,
    %c0_25 = arith.constant 0 : index
    %c0_26 = arith.constant 0 : index
    %c0_27 = arith.constant 0 : index
    %16 = vector.load %arg7[%c0_25, %c0_26, %c0_27] : memref<2x32x128xf32, #tpu.memory_space<vmem>>, vector<2x32x128xf32>
    %17 = arith.maximumf %16, %12 : vector<2x32x128xf32>
    %c0_28 = arith.constant 0 : index
    %c0_29 = arith.constant 0 : index
    %c0_30 = arith.constant 0 : index
    %18 = vector.load %arg7[%c0_28, %c0_29, %c0_30] : memref<2x32x128xf32, #tpu.memory_space<vmem>>, vector<2x32x128xf32>
    tpu.vector_store %arg7[%c0_28, %c0_29, %c0_30], %17 {strides = array<i32>} : memref<2x32x128xf32, #tpu.memory_space<vmem>>, vector<2x32x128xf32>,
    %c0_i32_31 = arith.constant 0 : i32
    %19 = arith.cmpi eq, %arg1, %c0_i32_31 : i32
    %20 = arith.extui %19 : i1 to i32
    %c0_i32_32 = arith.constant 0 : i32
    %21 = arith.cmpi ne, %20, %c0_i32_32 : i32
    scf.if %21 {
      %c0_33 = arith.constant 0 : index
      %c0_34 = arith.constant 0 : index
      %c0_35 = arith.constant 0 : index
      %22 = vector.load %arg6[%c0_33, %c0_34, %c0_35] : memref<2x32x128xf32, #tpu.memory_space<vmem>>, vector<2x32x128xf32>
      %cst = arith.constant dense<0.000000e+00> : vector<2x32xf32>
      %23 = vector.multi_reduction <add>, %22, %cst [2] : vector<2x32x128xf32> to vector<2x32xf32>
      %cst_36 = arith.constant 3.906250e-03 : f32
      %24 = vector.broadcast %cst_36 : f32 to vector<2x32xf32>
      %25 = arith.mulf %23, %24 : vector<2x32xf32>
      %c0_37 = arith.constant 0 : index
      %c0_38 = arith.constant 0 : index
      %c0_39 = arith.constant 0 : index
      %26 = vector.load %arg7[%c0_37, %c0_38, %c0_39] : memref<2x32x128xf32, #tpu.memory_space<vmem>>, vector<2x32x128xf32>
      %cst_40 = arith.constant dense<0xFF800000> : vector<2x32xf32>
      %27 = vector.multi_reduction <maximumf>, %26, %cst_40 [2] : vector<2x32x128xf32> to vector<2x32xf32>
      %c0_41 = arith.constant 0 : index
      %c0_42 = arith.constant 0 : index
      %28 = vector.load %arg3[%c0_41, %c0_42] : memref<8x32xf32, #tpu.memory_space<vmem>>, vector<8x32xf32>
      %c0_43 = arith.constant 0 : index
      %c0_44 = arith.constant 0 : index
      %29 = vector.load %arg4[%c0_43, %c0_44] : memref<32x8xf32, #tpu.memory_space<vmem>>, vector<32x8xf32>
      %cst_45 = arith.constant dense<0.000000e+00> : vector<2x8xf32>
      %30 = tpu.matmul %25, %28, %cst_45 {dimension_numbers = #tpu.dot_dimension_numbers<[1], [1], [0], [0], [0, 0, 1, 0], [], []>} : vector<2x32xf32>, vector<8x32xf32>, vector<2x8xf32> -> vector<2x8xf32>
      %cst_46 = arith.constant 0.000000e+00 : f32
      %31 = vector.broadcast %cst_46 : f32 to vector<2x8xf32>
      %32 = arith.maximumf %30, %31 : vector<2x8xf32>
      %cst_47 = arith.constant dense<0.000000e+00> : vector<2x8xf32>
      %33 = tpu.matmul %27, %28, %cst_47 {dimension_numbers = #tpu.dot_dimension_numbers<[1], [1], [0], [0], [0, 0, 1, 0], [], []>} : vector<2x32xf32>, vector<8x32xf32>, vector<2x8xf32> -> vector<2x8xf32>
      %cst_48 = arith.constant 0.000000e+00 : f32
      %34 = vector.broadcast %cst_48 : f32 to vector<2x8xf32>
      %35 = arith.maximumf %33, %34 : vector<2x8xf32>
      %36 = arith.addf %32, %35 : vector<2x8xf32>
      %cst_49 = arith.constant dense<0.000000e+00> : vector<2x32xf32>
      %37 = tpu.matmul %36, %29, %cst_49 {dimension_numbers = #tpu.dot_dimension_numbers<[1], [1], [0], [0], [0, 0, 1, 0], [], []>} : vector<2x8xf32>, vector<32x8xf32>, vector<2x32xf32> -> vector<2x32xf32>
      %38 = arith.negf %37 : vector<2x32xf32>
      %39 = math.exp %38 : vector<2x32xf32>
      %cst_50 = arith.constant 1.000000e+00 : f32
      %40 = vector.broadcast %cst_50 : f32 to vector<2x32xf32>
      %41 = arith.addf %40, %39 : vector<2x32xf32>
      %42 = arith.divf %40, %41 : vector<2x32xf32>
      %c0_51 = arith.constant 0 : index
      %c0_52 = arith.constant 0 : index
      %c0_53 = arith.constant 0 : index
      %43 = vector.load %arg5[%c0_51, %c0_52, %c0_53] : memref<1x2x32xf32, #tpu.memory_space<vmem>>, vector<1x2x32xf32>
      %44 = vector.shape_cast %43 : vector<1x2x32xf32> to vector<2x32xf32>
      %45 = vector.shape_cast %42 : vector<2x32xf32> to vector<1x2x32xf32>
      tpu.vector_store %arg5[%c0_51, %c0_52, %c0_53], %45 {strides = array<i32>} : memref<1x2x32xf32, #tpu.memory_space<vmem>>, vector<1x2x32xf32>,
    } else {
    }
    return
  }
  func.func @transform_0(%arg0: i32, %arg1: i32) -> (i32, i32, i32, i32) {
    %c0_i32 = arith.constant 0 : i32
    %c0_i32_0 = arith.constant 0 : i32
    %c0_i32_1 = arith.constant 0 : i32
    return %arg0, %c0_i32, %c0_i32_0, %arg1 : i32, i32, i32, i32
  }
  func.func @transform_1(%arg0: i32, %arg1: i32) -> (i32, i32) {
    %c0_i32 = arith.constant 0 : i32
    %c0_i32_0 = arith.constant 0 : i32
    %c0_i32_1 = arith.constant 0 : i32
    return %c0_i32, %c0_i32_0 : i32, i32
  }
  func.func @transform_2(%arg0: i32, %arg1: i32) -> (i32, i32) {
    %c0_i32 = arith.constant 0 : i32
    %c0_i32_0 = arith.constant 0 : i32
    %c0_i32_1 = arith.constant 0 : i32
    return %c0_i32, %c0_i32_0 : i32, i32
  }
  func.func @transform_3(%arg0: i32, %arg1: i32) -> (i32, i32, i32) {
    %c0_i32 = arith.constant 0 : i32
    %c0_i32_0 = arith.constant 0 : i32
    %c0_i32_1 = arith.constant 0 : i32
    return %arg0, %c0_i32, %c0_i32_0 : i32, i32, i32
  }
}

</mosaic_0001>

<llo_original>
// kernel: channel_attention.1
$region0: #{channel_attention.1}
  #allocation0 [shape = 'u32[]', space=smem, size = 0x4, offset = 0x4, fixed_abs, tag = 'smem constant byte address 0x4 - core index']
  #allocation1 [shape = 'u32[144,128]{1,0:T(1,128)}', space=vmem, size = 0x12000, scoped, tag = 'internal scratch']
  #allocation2 [shape = 'f32[2,32,128]{2,1,0:T(8,128)}', space=vmem, size = 0x8000, scoped, tag = 'scratch operand']
  #allocation3 [shape = 'f32[2,32,128]{2,1,0:T(8,128)}', space=vmem, size = 0x8000, scoped, tag = 'scratch operand']
  %s0 = inlined_call_operand.vmem [shape: f32[1,2,32,256], index: 0, kind: input, shape index: {}]
  %s1 = inlined_call_operand.vmem [shape: f32[8,32], index: 1, kind: input, shape index: {}]
  %s2 = inlined_call_operand.vmem [shape: f32[32,8], index: 2, kind: input, shape index: {}]
  %s3 = inlined_call_operand.hbm [shape: f32[1,2,32], index: 3, kind: output, shape index: {}]
  %s4 = sld [smem:[#allocation0]]
  $region30: #{channel_attention.1} parent=0
    _
  %s6 = ssub.s32 1, %s4
  %s7 = scalar_select 0, %s6, %s4
  $region1: #{channel_attention.1} parent=0
    #allocation4 [shape = 'u8[1024]{0}', space=vmem, size = 0x400, scoped, tag = 'output window, operand 0, single buffered']
    #allocation5 [shape = 's32[1]{0}', space=sflag, size = 0x4, scoped, tag = 'scoped memory for channel_attention.1']
    %8 = vsyncpa [#allocation5], 0
    // Predicated region
    $region2: #{channel_attention.1} parent=1 // pred_check
      _
    $region3: #{channel_attention.1} parent=1 // pred_check_branch
      %10 = sbr.rel (0) target = $region5
    $region4: #{channel_attention.1} parent=1 // pred_region
      _
    $region5: #{channel_attention.1} parent=1 // pred_fallthru
      _
    // Predicated region
    $region6: #{channel_attention.1} parent=1 // pred_check
      _
    $region7: #{channel_attention.1} parent=1 // pred_check_branch
      %12 = sbr.rel (0) target = $region9
    $region8: #{channel_attention.1} parent=1 // pred_region
      _
    $region9: #{channel_attention.1} parent=1 // pred_fallthru
      _
    // Predicated region
    $region10: #{channel_attention.1} parent=1 // pred_check
      _
    $region11: #{channel_attention.1} parent=1 // pred_check_branch
      %14 = sbr.rel (0) target = $region13
    $region12: #{channel_attention.1} parent=1 // pred_region
      _
    $region13: #{channel_attention.1} parent=1 // pred_fallthru
      _
    %p15 = scmp.eq.s32.totalorder 0, 0
    // Predicated region
    $region14: #{channel_attention.1} parent=1 // pred_check
      %p16 = pneg %p15
    $region15: #{channel_attention.1} parent=1 // pred_check_branch
      %18 = sbr.rel (%p16) target = $region17
    $region16: #{channel_attention.1} parent=1 // pred_region
      %19 = vst [vmem:[#allocation2] sm:$0xff] 0.0
      %20 = vst [vmem:[#allocation2 + $0x8] sm:$0xff] 0.0
      %21 = vst [vmem:[#allocation2 + $0x10] sm:$0xff] 0.0
      %22 = vst [vmem:[#allocation2 + $0x18] sm:$0xff] 0.0
      %23 = vst [vmem:[#allocation2 + $0x20] sm:$0xff] 0.0
      %24 = vst [vmem:[#allocation2 + $0x28] sm:$0xff] 0.0
      %25 = vst [vmem:[#allocation2 + $0x30] sm:$0xff] 0.0
      %26 = vst [vmem:[#allocation2 + $0x38] sm:$0xff] 0.0
      %27 = vst [vmem:[#allocation3] sm:$0xff] -inf
      %28 = vst [vmem:[#allocation3 + $0x8] sm:$0xff] -inf
      %29 = vst [vmem:[#allocation3 + $0x10] sm:$0xff] -inf
      %30 = vst [vmem:[#allocation3 + $0x18] sm:$0xff] -inf
      %31 = vst [vmem:[#allocation3 + $0x20] sm:$0xff] -inf
      %32 = vst [vmem:[#allocation3 + $0x28] sm:$0xff] -inf
      %33 = vst [vmem:[#allocation3 + $0x30] sm:$0xff] -inf
      %34 = vst [vmem:[#allocation3 + $0x38] sm:$0xff] -inf
    $region17: #{channel_attention.1} parent=1 // pred_fallthru
      _
    %v35 = vld [vmem:[%s0] sm:$0xff]
    %v36 = vld [vmem:[%s0 + $0x10] sm:$0xff]
    %v37 = vld [vmem:[%s0 + $0x20] sm:$0xff]
    %v38 = vld [vmem:[%s0 + $0x30] sm:$0xff]
    %v39 = vld [vmem:[%s0 + $0x40] sm:$0xff]
    %v40 = vld [vmem:[%s0 + $0x50] sm:$0xff]
    %v41 = vld [vmem:[%s0 + $0x60] sm:$0xff]
    %v42 = vld [vmem:[%s0 + $0x70] sm:$0xff]
    %v43 = vld [vmem:[#allocation2] sm:$0xff]
    %v44 = vld [vmem:[#allocation2 + $0x8] sm:$0xff]
    %v45 = vld [vmem:[#allocation2 + $0x10] sm:$0xff]
    %v46 = vld [vmem:[#allocation2 + $0x18] sm:$0xff]
    %v47 = vld [vmem:[#allocation2 + $0x20] sm:$0xff]
    %v48 = vld [vmem:[#allocation2 + $0x28] sm:$0xff]
    %v49 = vld [vmem:[#allocation2 + $0x30] sm:$0xff]
    %v50 = vld [vmem:[#allocation2 + $0x38] sm:$0xff]
    %v51 = vadd.f32 %v43, %v35
    %v52 = vadd.f32 %v44, %v36
    %v53 = vadd.f32 %v45, %v37
    %v54 = vadd.f32 %v46, %v38
    %v55 = vadd.f32 %v47, %v39
    %v56 = vadd.f32 %v48, %v40
    %v57 = vadd.f32 %v49, %v41
    %v58 = vadd.f32 %v50, %v42
    %59 = vst [vmem:[#allocation2] sm:$0xff] %v51
    %60 = vst [vmem:[#allocation2 + $0x8] sm:$0xff] %v52
    %61 = vst [vmem:[#allocation2 + $0x10] sm:$0xff] %v53
    %62 = vst [vmem:[#allocation2 + $0x18] sm:$0xff] %v54
    %63 = vst [vmem:[#allocation2 + $0x20] sm:$0xff] %v55
    %64 = vst [vmem:[#allocation2 + $0x28] sm:$0xff] %v56
    %65 = vst [vmem:[#allocation2 + $0x30] sm:$0xff] %v57
    %66 = vst [vmem:[#allocation2 + $0x38] sm:$0xff] %v58
    %v67 = vld [vmem:[#allocation3] sm:$0xff]
    %v68 = vld [vmem:[#allocation3 + $0x8] sm:$0xff]
    %v69 = vld [vmem:[#allocation3 + $0x10] sm:$0xff]
    %v70 = vld [vmem:[#allocation3 + $0x18] sm:$0xff]
    %v71 = vld [vmem:[#allocation3 + $0x20] sm:$0xff]
    %v72 = vld [vmem:[#allocation3 + $0x28] sm:$0xff]
    %v73 = vld [vmem:[#allocation3 + $0x30] sm:$0xff]
    %v74 = vld [vmem:[#allocation3 + $0x38] sm:$0xff]
    %v75 = vmax.f32 %v67, %v35
    %v76 = vmax.f32 %v68, %v36
    %v77 = vmax.f32 %v69, %v37
    %v78 = vmax.f32 %v70, %v38
    %v79 = vmax.f32 %v71, %v39
    %v80 = vmax.f32 %v72, %v40
    %v81 = vmax.f32 %v73, %v41
    %v82 = vmax.f32 %v74, %v42
    %83 = vst [vmem:[#allocation3] sm:$0xff] %v75
    %84 = vst [vmem:[#allocation3 + $0x8] sm:$0xff] %v76
    %85 = vst [vmem:[#allocation3 + $0x10] sm:$0xff] %v77
    %86 = vst [vmem:[#allocation3 + $0x18] sm:$0xff] %v78
    %87 = vst [vmem:[#allocation3 + $0x20] sm:$0xff] %v79
    %88 = vst [vmem:[#allocation3 + $0x28] sm:$0xff] %v80
    %89 = vst [vmem:[#allocation3 + $0x30] sm:$0xff] %v81
    %90 = vst [vmem:[#allocation3 + $0x38] sm:$0xff] %v82
    %v91 = vld [vmem:[%s0 + $0x8] sm:$0xff]
    %v92 = vld [vmem:[%s0 + $0x18] sm:$0xff]
    %v93 = vld [vmem:[%s0 + $0x28] sm:$0xff]
    %v94 = vld [vmem:[%s0 + $0x38] sm:$0xff]
    %v95 = vld [vmem:[%s0 + $0x48] sm:$0xff]
    %v96 = vld [vmem:[%s0 + $0x58] sm:$0xff]
    %v97 = vld [vmem:[%s0 + $0x68] sm:$0xff]
    %v98 = vld [vmem:[%s0 + $0x78] sm:$0xff]
    %v99 = vld [vmem:[#allocation2] sm:$0xff]
    %v100 = vld [vmem:[#allocation2 + $0x8] sm:$0xff]
    %v101 = vld [vmem:[#allocation2 + $0x10] sm:$0xff]
    %v102 = vld [vmem:[#allocation2 + $0x18] sm:$0xff]
    %v103 = vld [vmem:[#allocation2 + $0x20] sm:$0xff]
    %v104 = vld [vmem:[#allocation2 + $0x28] sm:$0xff]
    %v105 = vld [vmem:[#allocation2 + $0x30] sm:$0xff]
    %v106 = vld [vmem:[#allocation2 + $0x38] sm:$0xff]
    %v107 = vadd.f32 %v99, %v91
    %v108 = vadd.f32 %v100, %v92
    %v109 = vadd.f32 %v101, %v93
    %v110 = vadd.f32 %v102, %v94
    %v111 = vadd.f32 %v103, %v95
    %v112 = vadd.f32 %v104, %v96
    %v113 = vadd.f32 %v105, %v97
    %v114 = vadd.f32 %v106, %v98
    %115 = vst [vmem:[#allocation2] sm:$0xff] %v107
    %116 = vst [vmem:[#allocation2 + $0x8] sm:$0xff] %v108
    %117 = vst [vmem:[#allocation2 + $0x10] sm:$0xff] %v109
    %118 = vst [vmem:[#allocation2 + $0x18] sm:$0xff] %v110
    %119 = vst [vmem:[#allocation2 + $0x20] sm:$0xff] %v111
    %120 = vst [vmem:[#allocation2 + $0x28] sm:$0xff] %v112
    %121 = vst [vmem:[#allocation2 + $0x30] sm:$0xff] %v113
    %122 = vst [vmem:[#allocation2 + $0x38] sm:$0xff] %v114
    %v123 = vld [vmem:[#allocation3] sm:$0xff]
    %v124 = vld [vmem:[#allocation3 + $0x8] sm:$0xff]
    %v125 = vld [vmem:[#allocation3 + $0x10] sm:$0xff]
    %v126 = vld [vmem:[#allocation3 + $0x18] sm:$0xff]
    %v127 = vld [vmem:[#allocation3 + $0x20] sm:$0xff]
    %v128 = vld [vmem:[#allocation3 + $0x28] sm:$0xff]
    %v129 = vld [vmem:[#allocation3 + $0x30] sm:$0xff]
    %v130 = vld [vmem:[#allocation3 + $0x38] sm:$0xff]
    %v131 = vmax.f32 %v123, %v91
    %v132 = vmax.f32 %v124, %v92
    %v133 = vmax.f32 %v125, %v93
    %v134 = vmax.f32 %v126, %v94
    %v135 = vmax.f32 %v127, %v95
    %v136 = vmax.f32 %v128, %v96
    %v137 = vmax.f32 %v129, %v97
    %v138 = vmax.f32 %v130, %v98
    %139 = vst [vmem:[#allocation3] sm:$0xff] %v131
    %140 = vst [vmem:[#allocation3 + $0x8] sm:$0xff] %v132
    %141 = vst [vmem:[#allocation3 + $0x10] sm:$0xff] %v133
    %142 = vst [vmem:[#allocation3 + $0x18] sm:$0xff] %v134
    %143 = vst [vmem:[#allocation3 + $0x20] sm:$0xff] %v135
    %144 = vst [vmem:[#allocation3 + $0x28] sm:$0xff] %v136
    %145 = vst [vmem:[#allocation3 + $0x30] sm:$0xff] %v137
    %146 = vst [vmem:[#allocation3 + $0x38] sm:$0xff] %v138
    // Predicated region
    $region18: #{channel_attention.1} parent=1 // pred_check
      %p147 = pneg %p15
    $region19: #{channel_attention.1} parent=1 // pred_check_branch
      %149 = sbr.rel (%p147) target = $region21
    $region20: #{channel_attention.1} parent=1 // pred_region
      %v150 = vld [vmem:[#allocation2] sm:$0xff]
      %v151 = vld [vmem:[#allocation2 + $0x8] sm:$0xff]
      %v152 = vld [vmem:[#allocation2 + $0x10] sm:$0xff]
      %v153 = vld [vmem:[#allocation2 + $0x18] sm:$0xff]
      %v154 = vld [vmem:[#allocation2 + $0x20] sm:$0xff]
      %v155 = vld [vmem:[#allocation2 + $0x28] sm:$0xff]
      %v156 = vld [vmem:[#allocation2 + $0x30] sm:$0xff]
      %v157 = vld [vmem:[#allocation2 + $0x38] sm:$0xff]
      %158 = vadd.xlane.f32.xlu0 %v150
      %v159 = vpop.xlane.xlu0 %158
      %160 = vadd.xlane.f32.xlu0 %v151
      %v161 = vpop.xlane.xlu0 %160
      %162 = vadd.xlane.f32.xlu0 %v152
      %v163 = vpop.xlane.xlu0 %162
      %164 = vadd.xlane.f32.xlu0 %v153
      %v165 = vpop.xlane.xlu0 %164
      %166 = vadd.xlane.f32.xlu0 %v154
      %v167 = vpop.xlane.xlu0 %166
      %168 = vadd.xlane.f32.xlu0 %v155
      %v169 = vpop.xlane.xlu0 %168
      %170 = vadd.xlane.f32.xlu0 %v156
      %v171 = vpop.xlane.xlu0 %170
      %172 = vadd.xlane.f32.xlu0 %v157
      %v173 = vpop.xlane.xlu0 %172
      %v174 = vmul.f32 %v159, 0.00390625
      %v175 = vmul.f32 %v161, 0.00390625
      %v176 = vmul.f32 %v163, 0.00390625
      %v177 = vmul.f32 %v165, 0.00390625
      %v178 = vmul.f32 %v167, 0.00390625
      %v179 = vmul.f32 %v169, 0.00390625
      %v180 = vmul.f32 %v171, 0.00390625
      %v181 = vmul.f32 %v173, 0.00390625
      %v182 = vld [vmem:[#allocation3] sm:$0xff]
      %v183 = vld [vmem:[#allocation3 + $0x8] sm:$0xff]
      %v184 = vld [vmem:[#allocation3 + $0x10] sm:$0xff]
      %v185 = vld [vmem:[#allocation3 + $0x18] sm:$0xff]
      %v186 = vld [vmem:[#allocation3 + $0x20] sm:$0xff]
      %v187 = vld [vmem:[#allocation3 + $0x28] sm:$0xff]
      %v188 = vld [vmem:[#allocation3 + $0x30] sm:$0xff]
      %v189 = vld [vmem:[#allocation3 + $0x38] sm:$0xff]
      %190 = vmax.xlane.f32.xlu0 %v182
      %v191 = vpop.xlane.xlu0 %190
      %192 = vmax.xlane.f32.xlu0 %v183
      %v193 = vpop.xlane.xlu0 %192
      %194 = vmax.xlane.f32.xlu0 %v184
      %v195 = vpop.xlane.xlu0 %194
      %196 = vmax.xlane.f32.xlu0 %v185
      %v197 = vpop.xlane.xlu0 %196
      %198 = vmax.xlane.f32.xlu0 %v186
      %v199 = vpop.xlane.xlu0 %198
      %200 = vmax.xlane.f32.xlu0 %v187
      %v201 = vpop.xlane.xlu0 %200
      %202 = vmax.xlane.f32.xlu0 %v188
      %v203 = vpop.xlane.xlu0 %202
      %204 = vmax.xlane.f32.xlu0 %v189
      %v205 = vpop.xlane.xlu0 %204
      %v206 = vld [vmem:[%s1] sm:$0xff]
      %v207 = vld [vmem:[%s2] sm:$0xff]
      %v208 = vld [vmem:[%s2 + $0x8] sm:$0xff]
      %v209 = vld [vmem:[%s2 + $0x10] sm:$0xff]
      %v210 = vld [vmem:[%s2 + $0x18] sm:$0xff]
      %v219 = vlaneseq
      %v220 = vand.u32 %v219, 127
      %v221 = vlaneseq
      %v222 = vshrl.u32 %v221, 7
      %v223 = vsub.s32 %v220, %v222
      %v224 = vrot.slane %v174, %v223
      %v225 = vadd.s32 %v220, 4294967288
      %v226 = vlaneseq
      %v227 = vshrl.u32 %v226, 7
      %v228 = vsub.s32 %v225, %v227
      %v229 = vrot.slane %v175, %v228
      %vm230 = vcmask 130112
      %v231 = vsel %vm230, %v229, %v224
      %v232 = vadd.s32 %v220, 4294967280
      %v233 = vlaneseq
      %v234 = vshrl.u32 %v233, 7
      %v235 = vsub.s32 %v232, %v234
      %v236 = vrot.slane %v176, %v235
      %vm237 = vcmask 195712
      %v238 = vsel %vm237, %v236, %v231
      %v239 = vadd.s32 %v220, 4294967272
      %v240 = vlaneseq
      %v241 = vshrl.u32 %v240, 7
      %v242 = vsub.s32 %v239, %v241
      %v243 = vrot.slane %v177, %v242
      %vm244 = vcmask 261312
      %v245 = vsel %vm244, %v243, %v238
      %v246 = vlaneseq
      %v247 = vshrl.u32 %v246, 7
      %v248 = vsub.s32 %v220, %v247
      %v249 = vrot.slane %v178, %v248
      %v250 = vlaneseq
      %v251 = vshrl.u32 %v250, 7
      %v252 = vsub.s32 %v225, %v251
      %v253 = vrot.slane %v179, %v252
      %v254 = vsel %vm230, %v253, %v249
      %v255 = vlaneseq
      %v256 = vshrl.u32 %v255, 7
      %v257 = vsub.s32 %v232, %v256
      %v258 = vrot.slane %v180, %v257
      %v259 = vsel %vm237, %v258, %v254
      %v260 = vlaneseq
      %v261 = vshrl.u32 %v260, 7
      %v262 = vsub.s32 %v239, %v261
      %v263 = vrot.slane %v181, %v262
      %v264 = vsel %vm244, %v263, %v259
      %vm265 = vcmask 1041409
      %v266 = vsel %vm265, %v264, %v245
      %vm267 = vcmask 261120
      %v268 = vsel %vm267, %v266, 0
      %v271 = vsel %vm267, %v206, 0
      %273 = vmatprep.subr.mxu0 0.0
      %274 = vmatpush1.xpose.msra.mxu0 %v271
      %275 = vmatprep.subr.mxu0 0.0
      %276 = vmatpush1.xpose.msra.mxu0 0.0
      %277 = vmatprep.subr.mxu0 0.0
      %278 = vmatpush1.xpose.msra.mxu0 0.0
      %279 = vmatprep.subr.mxu0 0.0
      %280 = vmatpush1.xpose.msra.mxu0 0.0
      %281 = vmatprep.subr.mxu0 0.0
      %282 = vmatpush1.xpose.msra.mxu0 0.0
      %283 = vmatprep.subr.mxu0 0.0
      %284 = vmatpush1.xpose.msra.mxu0 0.0
      %285 = vmatprep.subr.mxu0 0.0
      %286 = vmatpush1.xpose.msra.mxu0 0.0
      %287 = vmatprep.subr.mxu0 0.0
      %288 = vmatpush1.xpose.msra.mxu0 0.0
      %289 = vmatprep.subr.mxu0 0.0
      %290 = vmatpush1.xpose.msra.mxu0 0.0
      %291 = vmatprep.subr.mxu0 0.0
      %292 = vmatpush1.xpose.msra.mxu0 0.0
      %293 = vmatprep.subr.mxu0 0.0
      %294 = vmatpush1.xpose.msra.mxu0 0.0
      %295 = vmatprep.subr.mxu0 0.0
      %296 = vmatpush1.xpose.msra.mxu0 0.0
      %297 = vmatprep.subr.mxu0 0.0
      %298 = vmatpush1.xpose.msra.mxu0 0.0
      %299 = vmatprep.subr.mxu0 0.0
      %300 = vmatpush1.xpose.msra.mxu0 0.0
      %301 = vmatprep.subr.mxu0 0.0
      %302 = vmatpush1.xpose.msra.mxu0 0.0
      %303 = vmatprep.subr.mxu0 0.0
      %304 = vmatpush1.xpose.msra.mxu0 0.0
      %305 = vmatprep.subr.mxu0 0.0
      %306 = vmatpush1.xpose.msra.mxu0 0.0
      %307 = vmatprep.subr.mxu0 0.0
      %308 = vmatpush1.xpose.msra.mxu0 0.0
      %309 = vmatprep.subr.mxu0 0.0
      %310 = vmatpush1.xpose.msra.mxu0 0.0
      %311 = vmatprep.subr.mxu0 0.0
      %312 = vmatpush1.xpose.msra.mxu0 0.0
      %313 = vmatprep.subr.mxu0 0.0
      %314 = vmatpush1.xpose.msra.mxu0 0.0
      %315 = vmatprep.subr.mxu0 0.0
      %316 = vmatpush1.xpose.msra.mxu0 0.0
      %317 = vmatprep.subr.mxu0 0.0
      %318 = vmatpush1.xpose.msra.mxu0 0.0
      %319 = vmatprep.subr.mxu0 0.0
      %320 = vmatpush1.xpose.msra.mxu0 0.0
      %321 = vmatprep.subr.mxu0 0.0
      %322 = vmatpush1.xpose.msra.mxu0 0.0
      %323 = vmatprep.subr.mxu0 0.0
      %324 = vmatpush1.xpose.msra.mxu0 0.0
      %325 = vmatprep.subr.mxu0 0.0
      %326 = vmatpush1.xpose.msra.mxu0 0.0
      %327 = vmatprep.subr.mxu0 0.0
      %328 = vmatpush1.xpose.msra.mxu0 0.0
      %329 = vmatprep.subr.mxu0 0.0
      %330 = vmatpush1.xpose.msra.mxu0 0.0
      %331 = vmatprep.subr.mxu0 0.0
      %332 = vmatpush1.xpose.msra.mxu0 0.0
      %333 = vmatprep.subr.mxu0 0.0
      %334 = vmatpush1.xpose.msra.mxu0 0.0
      %335 = vmatprep.subr.mxu0 0.0
      %336 = vmatpush1.xpose.msra.mxu0 0.0
      %337 = vmatprep.mubr.f32.mxu0 0.0
      %338 = vmatmul.mubr.f32.gmra.mrb[0].mxu0 %v268
      %v339 = vpop.f32.mrb[0].mxu0
      %v340 = vadd.f32 0.0, %v339
      %v341 = vpop.f32.mrb[0].mxu0
      %342 = vdwg.mxu0
      %v343 = vmax.f32 %v340, 0.0
      %v352 = vlaneseq
      %v353 = vshrl.u32 %v352, 7
      %v354 = vsub.s32 %v220, %v353
      %v355 = vrot.slane %v191, %v354
      %v356 = vlaneseq
      %v357 = vshrl.u32 %v356, 7
      %v358 = vsub.s32 %v225, %v357
      %v359 = vrot.slane %v193, %v358
      %v360 = vsel %vm230, %v359, %v355
      %v361 = vlaneseq
      %v362 = vshrl.u32 %v361, 7
      %v363 = vsub.s32 %v232, %v362
      %v364 = vrot.slane %v195, %v363
      %v365 = vsel %vm237, %v364, %v360
      %v366 = vlaneseq
      %v367 = vshrl.u32 %v366, 7
      %v368 = vsub.s32 %v239, %v367
      %v369 = vrot.slane %v197, %v368
      %v370 = vsel %vm244, %v369, %v365
      %v371 = vlaneseq
      %v372 = vshrl.u32 %v371, 7
      %v373 = vsub.s32 %v220, %v372
      %v374 = vrot.slane %v199, %v373
      %v375 = vlaneseq
      %v376 = vshrl.u32 %v375, 7
      %v377 = vsub.s32 %v225, %v376
      %v378 = vrot.slane %v201, %v377
      %v379 = vsel %vm230, %v378, %v374
      %v380 = vlaneseq
      %v381 = vshrl.u32 %v380, 7
      %v382 = vsub.s32 %v232, %v381
      %v383 = vrot.slane %v203, %v382
      %v384 = vsel %vm237, %v383, %v379
      %v385 = vlaneseq
      %v386 = vshrl.u32 %v385, 7
      %v387 = vsub.s32 %v239, %v386
      %v388 = vrot.slane %v205, %v387
      %v389 = vsel %vm244, %v388, %v384
      %v390 = vsel %vm265, %v389, %v370
      %v391 = vsel %vm267, %v390, 0
      %393 = vmatprep.subr.mxu0 0.0
      %394 = vmatpush1.xpose.msra.mxu0 %v271
      %395 = vmatprep.subr.mxu0 0.0
      %396 = vmatpush1.xpose.msra.mxu0 0.0
      %397 = vmatprep.subr.mxu0 0.0
      %398 = vmatpush1.xpose.msra.mxu0 0.0
      %399 = vmatprep.subr.mxu0 0.0
      %400 = vmatpush1.xpose.msra.mxu0 0.0
      %401 = vmatprep.subr.mxu0 0.0
      %402 = vmatpush1.xpose.msra.mxu0 0.0
      %403 = vmatprep.subr.mxu0 0.0
      %404 = vmatpush1.xpose.msra.mxu0 0.0
      %405 = vmatprep.subr.mxu0 0.0
      %406 = vmatpush1.xpose.msra.mxu0 0.0
      %407 = vmatprep.subr.mxu0 0.0
      %408 = vmatpush1.xpose.msra.mxu0 0.0
      %409 = vmatprep.subr.mxu0 0.0
      %410 = vmatpush1.xpose.msra.mxu0 0.0
      %411 = vmatprep.subr.mxu0 0.0
      %412 = vmatpush1.xpose.msra.mxu0 0.0
      %413 = vmatprep.subr.mxu0 0.0
      %414 = vmatpush1.xpose.msra.mxu0 0.0
      %415 = vmatprep.subr.mxu0 0.0
      %416 = vmatpush1.xpose.msra.mxu0 0.0
      %417 = vmatprep.subr.mxu0 0.0
      %418 = vmatpush1.xpose.msra.mxu0 0.0
      %419 = vmatprep.subr.mxu0 0.0
      %420 = vmatpush1.xpose.msra.mxu0 0.0
      %421 = vmatprep.subr.mxu0 0.0
      %422 = vmatpush1.xpose.msra.mxu0 0.0
      %423 = vmatprep.subr.mxu0 0.0
      %424 = vmatpush1.xpose.msra.mxu0 0.0
      %425 = vmatprep.subr.mxu0 0.0
      %426 = vmatpush1.xpose.msra.mxu0 0.0
      %427 = vmatprep.subr.mxu0 0.0
      %428 = vmatpush1.xpose.msra.mxu0 0.0
      %429 = vmatprep.subr.mxu0 0.0
      %430 = vmatpush1.xpose.msra.mxu0 0.0
      %431 = vmatprep.subr.mxu0 0.0
      %432 = vmatpush1.xpose.msra.mxu0 0.0
      %433 = vmatprep.subr.mxu0 0.0
      %434 = vmatpush1.xpose.msra.mxu0 0.0
      %435 = vmatprep.subr.mxu0 0.0
      %436 = vmatpush1.xpose.msra.mxu0 0.0
      %437 = vmatprep.subr.mxu0 0.0
      %438 = vmatpush1.xpose.msra.mxu0 0.0
      %439 = vmatprep.subr.mxu0 0.0
      %440 = vmatpush1.xpose.msra.mxu0 0.0
      %441 = vmatprep.subr.mxu0 0.0
      %442 = vmatpush1.xpose.msra.mxu0 0.0
      %443 = vmatprep.subr.mxu0 0.0
      %444 = vmatpush1.xpose.msra.mxu0 0.0
      %445 = vmatprep.subr.mxu0 0.0
      %446 = vmatpush1.xpose.msra.mxu0 0.0
      %447 = vmatprep.subr.mxu0 0.0
      %448 = vmatpush1.xpose.msra.mxu0 0.0
      %449 = vmatprep.subr.mxu0 0.0
      %450 = vmatpush1.xpose.msra.mxu0 0.0
      %451 = vmatprep.subr.mxu0 0.0
      %452 = vmatpush1.xpose.msra.mxu0 0.0
      %453 = vmatprep.subr.mxu0 0.0
      %454 = vmatpush1.xpose.msra.mxu0 0.0
      %455 = vmatprep.subr.mxu0 0.0
      %456 = vmatpush1.xpose.msra.mxu0 0.0
      %457 = vmatprep.mubr.f32.mxu0 0.0
      %458 = vmatmul.mubr.f32.gmra.mrb[0].mxu0 %v391
      %v459 = vpop.f32.mrb[0].mxu0
      %v460 = vadd.f32 0.0, %v459
      %v461 = vpop.f32.mrb[0].mxu0
      %462 = vdwg.mxu0
      %v463 = vmax.f32 %v460, 0.0
      %v464 = vadd.f32 %v343, %v463
      %vm465 = vcmask 64512
      %v467 = vsel %vm465, %v464, 0
      %v470 = vsel %vm465, %v207, 0
      %v473 = vsel %vm465, %v208, 0
      %v476 = vsel %vm465, %v209, 0
      %v479 = vsel %vm465, %v210, 0
      %481 = vmatprep.subr.mxu0 0.0
      %482 = vmatpush1.xpose.msra.mxu0 %v470
      %483 = vmatprep.subr.mxu0 0.0
      %484 = vmatpush1.xpose.msra.mxu0 %v473
      %485 = vmatprep.subr.mxu0 0.0
      %486 = vmatpush1.xpose.msra.mxu0 %v476
      %487 = vmatprep.subr.mxu0 0.0
      %488 = vmatpush1.xpose.msra.mxu0 %v479
      %489 = vmatprep.subr.mxu0 0.0
      %490 = vmatpush1.xpose.msra.mxu0 0.0
      %491 = vmatprep.subr.mxu0 0.0
      %492 = vmatpush1.xpose.msra.mxu0 0.0
      %493 = vmatprep.subr.mxu0 0.0
      %494 = vmatpush1.xpose.msra.mxu0 0.0
      %495 = vmatprep.subr.mxu0 0.0
      %496 = vmatpush1.xpose.msra.mxu0 0.0
      %497 = vmatprep.subr.mxu0 0.0
      %498 = vmatpush1.xpose.msra.mxu0 0.0
      %499 = vmatprep.subr.mxu0 0.0
      %500 = vmatpush1.xpose.msra.mxu0 0.0
      %501 = vmatprep.subr.mxu0 0.0
      %502 = vmatpush1.xpose.msra.mxu0 0.0
      %503 = vmatprep.subr.mxu0 0.0
      %504 = vmatpush1.xpose.msra.mxu0 0.0
      %505 = vmatprep.subr.mxu0 0.0
      %506 = vmatpush1.xpose.msra.mxu0 0.0
      %507 = vmatprep.subr.mxu0 0.0
      %508 = vmatpush1.xpose.msra.mxu0 0.0
      %509 = vmatprep.subr.mxu0 0.0
      %510 = vmatpush1.xpose.msra.mxu0 0.0
      %511 = vmatprep.subr.mxu0 0.0
      %512 = vmatpush1.xpose.msra.mxu0 0.0
      %513 = vmatprep.subr.mxu0 0.0
      %514 = vmatpush1.xpose.msra.mxu0 0.0
      %515 = vmatprep.subr.mxu0 0.0
      %516 = vmatpush1.xpose.msra.mxu0 0.0
      %517 = vmatprep.subr.mxu0 0.0
      %518 = vmatpush1.xpose.msra.mxu0 0.0
      %519 = vmatprep.subr.mxu0 0.0
      %520 = vmatpush1.xpose.msra.mxu0 0.0
      %521 = vmatprep.subr.mxu0 0.0
      %522 = vmatpush1.xpose.msra.mxu0 0.0
      %523 = vmatprep.subr.mxu0 0.0
      %524 = vmatpush1.xpose.msra.mxu0 0.0
      %525 = vmatprep.subr.mxu0 0.0
      %526 = vmatpush1.xpose.msra.mxu0 0.0
      %527 = vmatprep.subr.mxu0 0.0
      %528 = vmatpush1.xpose.msra.mxu0 0.0
      %529 = vmatprep.subr.mxu0 0.0
      %530 = vmatpush1.xpose.msra.mxu0 0.0
      %531 = vmatprep.subr.mxu0 0.0
      %532 = vmatpush1.xpose.msra.mxu0 0.0
      %533 = vmatprep.subr.mxu0 0.0
      %534 = vmatpush1.xpose.msra.mxu0 0.0
      %535 = vmatprep.subr.mxu0 0.0
      %536 = vmatpush1.xpose.msra.mxu0 0.0
      %537 = vmatprep.subr.mxu0 0.0
      %538 = vmatpush1.xpose.msra.mxu0 0.0
      %539 = vmatprep.subr.mxu0 0.0
      %540 = vmatpush1.xpose.msra.mxu0 0.0
      %541 = vmatprep.subr.mxu0 0.0
      %542 = vmatpush1.xpose.msra.mxu0 0.0
      %543 = vmatprep.subr.mxu0 0.0
      %544 = vmatpush1.xpose.msra.mxu0 0.0
      %545 = vmatprep.mubr.f32.mxu0 0.0
      %546 = vmatmul.mubr.f32.gmra.mrb[0].mxu0 %v467
      %v547 = vpop.f32.mrb[0].mxu0
      %v548 = vadd.f32 0.0, %v547
      %v549 = vpop.f32.mrb[0].mxu0
      %550 = vdwg.mxu0
      %v551 = vxor.u32 %v548, 2147483648
      %v552 = vmul.f32 %v551, 1.442695
      %v553 = vpow.pop %v552
      %v554 = vadd.f32 %v553, 1.0
      %v555 = vrcp.pop %v554
      %v556 = vmul.f32 1.0, %v555
      %vm557 = vcmask 254976
      %558 = vst.msk [vmem:[#allocation4] sm:$0x3] %vm557, %v556
    $region21: #{channel_attention.1} parent=1 // pred_fallthru
      _
    // Predicated region
    $region22: #{channel_attention.1} parent=1 // pred_check
      _
    $region23: #{channel_attention.1} parent=1 // pred_check_branch
      %560 = sbr.rel (0) target = $region25
    $region24: #{channel_attention.1} parent=1 // pred_region
      %s562 = ssub.s32 32, 32
      %563 = vsyncadd [#allocation5], %s562
      %s565 = sshll.u32 [#allocation4], 4
      %s566 = int_to_ptr.vmem [resolvable:$true] %s565
      %568 = dma.vmem_to_hbm [thread:$0]  %s566, 32, %s3, [#allocation5]
    $region25: #{channel_attention.1} parent=1 // pred_fallthru
      _
    // Predicated region
    $region26: #{channel_attention.1} parent=1 // pred_check
      _
    $region27: #{channel_attention.1} parent=1 // pred_check_branch
      %570 = sbr.rel (0) target = $region29
    $region28: #{channel_attention.1} parent=1 // pred_region
      %571 = dma.done [#allocation5], 32
    $region29: #{channel_attention.1} parent=1 // pred_fallthru
      _
    %572 = vsyncpa [#allocation5], 1

</llo_original>
